<compile_context>
chip_gen: v6e
topology: v6e:2x2x1
jax: 0.10.0
libtpu: 0.0.40
codegen_flags: <defaults>
</compile_context>

<pallas_src>
import math
import functools

import jax
import jax.numpy as jnp
from jax import lax
from jax.experimental import pallas as pl
from jax.experimental.pallas import tpu as pltpu


# --------------------------------------------------------------------------- #
# helpers
# --------------------------------------------------------------------------- #

def _layernorm(v, gamma, beta, eps):
    mu = jnp.mean(v, axis=-1, keepdims=True)
    var = jnp.mean((v - mu) ** 2, axis=-1, keepdims=True)
    return (v - mu) * lax.rsqrt(var + eps) * gamma + beta


def _vmem_cap_bytes():
    try:
        info = pltpu.get_tpu_info()
        for name in ("vmem_capacity_bytes", "vmem_size_bytes", "vmem_bytes"):
            val = getattr(info, name, None)
            if val:
                return int(val)
    except Exception:
        pass
    return 64 * 1024 * 1024          # conservative fallback (valid on v7x too)


def _vmem_limit(need_bytes):
    cap = _vmem_cap_bytes()
    return int(min(int(cap * 0.9), max(int(need_bytes), 48 * 1024 * 1024)))


@functools.lru_cache(maxsize=None)
def _single_buffer_supported():
    """Probe once whether pipeline_mode=pl.Buffered(1) (single-buffered
    grid-invariant inputs) works on this JAX/Pallas build."""
    def _copy(x_ref, o_ref):
        o_ref[...] = x_ref[...]
    try:
        spec = pl.BlockSpec((8, 128), lambda i: (0, 0),
                            pipeline_mode=pl.Buffered(1))
        f = pl.pallas_call(
            _copy,
            out_shape=jax.ShapeDtypeStruct((8, 128), jnp.float32),
            grid=(2,),
            in_specs=[spec],
            out_specs=pl.BlockSpec((8, 128), lambda i: (0, 0)),
        )
        jax.block_until_ready(f(jnp.zeros((8, 128), jnp.float32)))
        return True
    except Exception:
        return False


def _invariant_spec(a, single_buffer):
    """Full-array, grid-invariant BlockSpec (weights). Single-buffered when
    supported so the second pipeline buffer does not waste VMEM."""
    n = a.ndim
    if single_buffer:
        return pl.BlockSpec(a.shape, lambda *_: (0,) * n,
                            pipeline_mode=pl.Buffered(1))
    return pl.BlockSpec(a.shape, lambda *_: (0,) * n)


# --------------------------------------------------------------------------- #
# kernel 1: LayerNorm1 + fused QKV projection (row-tiled)
# --------------------------------------------------------------------------- #

def ln_qkv_kernel(x_ref, g_ref, b_ref, w_ref, bias_ref, o_ref, *, eps):
    x = x_ref[...].astype(jnp.float32)                       # (tr, D)
    xn = _layernorm(x, g_ref[0], b_ref[0], eps)
    qkv = jnp.dot(xn.astype(w_ref.dtype), w_ref[...],
                  preferred_element_type=jnp.float32) + bias_ref[0]
    o_ref[...] = qkv.astype(o_ref.dtype)                     # (tr, 3D) bf16


# --------------------------------------------------------------------------- #
# kernel 2: causal flash attention (B, head_groups, q_tiles, kv_tiles)
# --------------------------------------------------------------------------- #

def attn_kernel(mask_ref, q_ref, k_ref, v_ref, o_ref, m_ref, l_ref, acc_ref,
                *, hpb, hd, tq, tkv, seq_len, scale, q_col0, k_col0, v_col0):
    qi = pl.program_id(2)
    kj = pl.program_id(3)
    nkv = pl.num_programs(3)

    @pl.when(kj == 0)
    def _():
        m_ref[...] = jnp.full(m_ref.shape, -jnp.inf, jnp.float32)
        l_ref[...] = jnp.zeros(l_ref.shape, jnp.float32)
        acc_ref[...] = jnp.zeros(acc_ref.shape, jnp.float32)

    # Causal block skip: this whole KV tile lies strictly above the diagonal.
    @pl.when(kj * tkv < (qi + 1) * tq)
    def _():
        q = q_ref[...]                                        # (tq, qw) bf16
        k = k_ref[...]                                        # (tkv, qw) bf16
        v = v_ref[...]

        # Causal + additive key mask, built ONCE per (q,kv) tile and shared by
        # every head in the group (hoisted out of the head loop).
        rows = qi * tq + lax.broadcasted_iota(jnp.int32, (tq, tkv), 0)
        cols = kj * tkv + lax.broadcasted_iota(jnp.int32, (tq, tkv), 1)
        keep = (rows >= cols) & (cols < seq_len)
        col_ok = (kj * tkv + lax.broadcasted_iota(jnp.int32, (1, tkv), 1)) < seq_len
        bias = jnp.where(col_ok, mask_ref[...], 0.0)          # (1, tkv) f32

        for hi in range(hpb):                                 # tiny static unroll
            qh = q[:, q_col0 + hi * hd: q_col0 + (hi + 1) * hd]
            kh = k[:, k_col0 + hi * hd: k_col0 + (hi + 1) * hd]
            vh = v[:, v_col0 + hi * hd: v_col0 + (hi + 1) * hd]

            s = lax.dot_general(qh, kh, (((1,), (1,)), ((), ())),
                                preferred_element_type=jnp.float32)
            s = jnp.where(keep, s * scale + bias, jnp.float32(-10000.0))

            m_prev = m_ref[hi]
            m_new = jnp.maximum(m_prev, jnp.max(s, axis=-1, keepdims=True))
            p = jnp.exp(s - m_new)
            alpha = jnp.exp(m_prev - m_new)
            l_ref[hi] = alpha * l_ref[hi] + jnp.sum(p, axis=-1, keepdims=True)
            acc_ref[hi] = alpha * acc_ref[hi] + jnp.dot(
                p.astype(vh.dtype), vh, preferred_element_type=jnp.float32)
            m_ref[hi] = m_new

    @pl.when(kj == nkv - 1)
    def _():
        outs = [acc_ref[hi] * pl.reciprocal(l_ref[hi], approx=True)
                for hi in range(hpb)]
        ctx = outs[0] if hpb == 1 else jnp.concatenate(outs, axis=-1)
        o_ref[...] = ctx.astype(o_ref.dtype)                  # lane-dense store


# --------------------------------------------------------------------------- #
# kernel 3: out-proj + residual + LayerNorm2 + MLP + residual (row-tiled)
# --------------------------------------------------------------------------- #

def proj_mlp_kernel(ctx_ref, x_ref, wo_ref, bo_ref, g2_ref, b2_ref,
                    w1_ref, bias1_ref, w2_ref, bias2_ref, o_ref, *, eps):
    cdt = wo_ref.dtype
    attn = jnp.dot(ctx_ref[...].astype(cdt), wo_ref[...],
                   preferred_element_type=jnp.float32) + bo_ref[0]
    x1 = x_ref[...].astype(jnp.float32) + attn                # residual 1
    xn = _layernorm(x1, g2_ref[0], b2_ref[0], eps)
    h = jnp.dot(xn.astype(cdt), w1_ref[...],
                preferred_element_type=jnp.float32) + bias1_ref[0]
    h = jax.nn.gelu(h, approximate=True)                      # tanh-gelu -> EUP
    h2 = jnp.dot(h.astype(cdt), w2_ref[...],
                 preferred_element_type=jnp.float32) + bias2_ref[0]
    o_ref[...] = (x1 + h2).astype(o_ref.dtype)                # residual 2


# --------------------------------------------------------------------------- #
# wrapper
# --------------------------------------------------------------------------- #

def gpt_block_forward(x, params, *, num_heads, eps=1e-5, attention_mask=None,
                      compute_dtype=jnp.bfloat16,
                      row_tile=512, q_tile=256, kv_tile=256):
    B, S, D = x.shape
    H = num_heads
    hd = D // H
    BS = B * S

    (ln1g, ln1b, wq, bq, wk, bk, wv, bv, wo, bo,
     ln2g, ln2b, w1, b1, w2, b2) = params
    inter = w1.shape[1]
    isz = jnp.dtype(compute_dtype).itemsize

    # Fused QKV weights; all matmul weights cast once to the MXU compute dtype.
    # TODO(synk): on v7x the dense weights could additionally use fp8 (e4m3).
    wqkv = jnp.concatenate([wq, wk, wv], axis=1).astype(compute_dtype)   # (D, 3D)
    bqkv = jnp.concatenate([bq, bk, bv], axis=1).astype(jnp.float32)     # (1, 3D)
    wo_c = wo.astype(compute_dtype)
    w1_c = w1.astype(compute_dtype)
    w2_c = w2.astype(compute_dtype)
    bo_f = bo.astype(jnp.float32)
    b1_f = b1.astype(jnp.float32)
    b2_f = b2.astype(jnp.float32)
    ln1g_f = ln1g.astype(jnp.float32); ln1b_f = ln1b.astype(jnp.float32)
    ln2g_f = ln2g.astype(jnp.float32); ln2b_f = ln2b.astype(jnp.float32)

    # The reference module simply *adds* attention_mask to the scores, so the
    # mask must already be additive (0 / -10000), broadcastable over heads and
    # query positions.
    # TODO(synk): only per-key additive masks reshapeable to (B, 1, S) are
    # supported; full (B, H, S, S) additive masks are not plumbed in.
    if attention_mask is None:
        amask = jnp.zeros((B, 1, S), jnp.float32)
    else:
        amask = jnp.reshape(attention_mask.astype(jnp.float32), (B, 1, S))

    # Head grouping so every q/k/v column slab and ctx store is lane-dense:
    # 128 lanes when possible, otherwise the full model dim.
    if hd % 128 == 0:
        hpb = 1
    elif (128 % hd == 0) and (H % (128 // hd) == 0) and (D % 128 == 0):
        hpb = 128 // hd
    else:
        hpb = H
    gw = hpb * hd
    G = H // hpb
    split_cols = (gw % 128 == 0)       # can (B,S,3D) be column-blocked per group?

    tr = min(row_tile, BS)
    tq = min(q_tile, S)
    tkv = min(kv_tile, S)
    nr = pl.cdiv(BS, tr)
    nq = pl.cdiv(S, tq)
    nkv = pl.cdiv(S, tkv)

    single_buf = _single_buffer_supported()
    buf = 1 if single_buf else 2
    wspec = functools.partial(_invariant_spec, single_buffer=single_buf)

    # ------------------ 1) LayerNorm1 + fused QKV projection ---------------- #
    x2 = x.reshape(BS, D)
    w1bytes = wqkv.size * isz + (bqkv.size + ln1g_f.size + ln1b_f.size) * 4
    need1 = int(1.25 * (buf * w1bytes
                        + 2 * (tr * D * 4 + tr * 3 * D * isz)
                        + tr * D * 6 + tr * 3 * D * 6))
    qkv = pl.pallas_call(
        functools.partial(ln_qkv_kernel, eps=eps),
        out_shape=jax.ShapeDtypeStruct((BS, 3 * D), compute_dtype),
        grid=(nr,),
        in_specs=[pl.BlockSpec((tr, D), lambda r: (r, 0)),
                  wspec(ln1g_f), wspec(ln1b_f), wspec(wqkv), wspec(bqkv)],
        out_specs=pl.BlockSpec((tr, 3 * D), lambda r: (r, 0)),
        compiler_params=pltpu.CompilerParams(
            dimension_semantics=("parallel",),
            vmem_limit_bytes=_vmem_limit(need1)),
    )(x2, ln1g_f, ln1b_f, wqkv, bqkv)

    # ------------------ 2) causal flash attention ---------------------------- #
    qkv3 = qkv.reshape(B, S, 3 * D)
    if split_cols:
        kcol0 = D // gw
        vcol0 = 2 * D // gw
        q_spec = pl.BlockSpec((None, tq, gw), lambda b, g, qi, kj: (b, qi, g))
        k_spec = pl.BlockSpec((None, tkv, gw), lambda b, g, qi, kj: (b, kj, kcol0 + g))
        v_spec = pl.BlockSpec((None, tkv, gw), lambda b, g, qi, kj: (b, kj, vcol0 + g))
        q_col0, k_col0, v_col0 = 0, 0, 0
        qw = gw
    else:
        # gw == D but D is not 128-aligned (tiny/test configs): fall back to
        # full-width qkv row blocks and slice the q/k/v columns in-kernel.
        q_spec = pl.BlockSpec((None, tq, 3 * D), lambda b, g, qi, kj: (b, qi, 0))
        k_spec = pl.BlockSpec((None, tkv, 3 * D), lambda b, g, qi, kj: (b, kj, 0))
        v_spec = pl.BlockSpec((None, tkv, 3 * D), lambda b, g, qi, kj: (b, kj, 0))
        q_col0, k_col0, v_col0 = 0, D, 2 * D
        qw = 3 * D

    need2 = int(1.25 * (2 * (tq * qw + 2 * tkv * qw + tq * gw) * isz
                        + 2 * tkv * 4
                        + hpb * (tq * 128 * 8 + tq * hd * 4)
                        + 4 * tq * tkv * 4))
    attn_k = functools.partial(
        attn_kernel, hpb=hpb, hd=hd, tq=tq, tkv=tkv, seq_len=S,
        scale=1.0 / math.sqrt(hd),
        q_col0=q_col0, k_col0=k_col0, v_col0=v_col0)
    ctx = pl.pallas_call(
        attn_k,
        out_shape=jax.ShapeDtypeStruct((B, S, D), compute_dtype),
        grid=(B, G, nq, nkv),
        in_specs=[pl.BlockSpec((None, 1, tkv), lambda b, g, qi, kj: (b, 0, kj)),
                  q_spec, k_spec, v_spec],
        out_specs=pl.BlockSpec((None, tq, gw), lambda b, g, qi, kj: (b, qi, g)),
        scratch_shapes=[pltpu.VMEM((hpb, tq, 1), jnp.float32),   # running max
                        pltpu.VMEM((hpb, tq, 1), jnp.float32),   # running sum
                        pltpu.VMEM((hpb, tq, hd), jnp.float32)], # ctx accumulator
        compiler_params=pltpu.CompilerParams(
            dimension_semantics=("parallel", "parallel", "parallel", "arbitrary"),
            vmem_limit_bytes=_vmem_limit(need2)),
    )(amask, qkv3, qkv3, qkv3)

    # ------------------ 3) out-proj + residual + LN2 + MLP + residual -------- #
    ctx2 = ctx.reshape(BS, D)
    w3bytes = ((wo_c.size + w1_c.size + w2_c.size) * isz
               + (bo_f.size + b1_f.size + b2_f.size + ln2g_f.size + ln2b_f.size) * 4)
    need3 = int(1.25 * (buf * w3bytes
                        + 2 * (tr * D * isz + 2 * tr * D * 4)
                        + tr * inter * 6 + tr * D * 16))
    out2 = pl.pallas_call(
        functools.partial(proj_mlp_kernel, eps=eps),
        out_shape=jax.ShapeDtypeStruct((BS, D), x.dtype),
        grid=(nr,),
        in_specs=[pl.BlockSpec((tr, D), lambda r: (r, 0)),
                  pl.BlockSpec((tr, D), lambda r: (r, 0)),
                  wspec(wo_c), wspec(bo_f), wspec(ln2g_f), wspec(ln2b_f),
                  wspec(w1_c), wspec(b1_f), wspec(w2_c), wspec(b2_f)],
        out_specs=pl.BlockSpec((tr, D), lambda r: (r, 0)),
        compiler_params=pltpu.CompilerParams(
            dimension_semantics=("parallel",),
            vmem_limit_bytes=_vmem_limit(need3)),
    )(ctx2, x2, wo_c, bo_f, ln2g_f, ln2b_f, w1_c, b1_f, w2_c, b2_f)

    return out2.reshape(B, S, D), attention_mask


# --------------------------------------------------------------------------- #
# pure-JAX reference (mirrors the PyTorch module) + params
# --------------------------------------------------------------------------- #

def gpt_block_reference(x, params, *, num_heads, eps=1e-5, attention_mask=None):
    (ln1g, ln1b, wq, bq, wk, bk, wv, bv, wo, bo,
     ln2g, ln2b, w1, b1, w2, b2) = params
    B, S, D = x.shape
    hd = D // num_heads

    def ln(v, g, b):
        mu = jnp.mean(v, axis=-1, keepdims=True)
        var = jnp.mean((v - mu) ** 2, axis=-1, keepdims=True)
        return (v - mu) * lax.rsqrt(var + eps) * g + b

    residual = x
    xn = ln(x, ln1g, ln1b)
    q = xn @ wq + bq
    k = xn @ wk + bk
    v = xn @ wv + bv

    def split(t):
        return t.reshape(B, S, num_heads, hd).transpose(0, 2, 1, 3)

    qh, kh, vh = split(q), split(k), split(v)
    s = jnp.einsum('bhqd,bhkd->bhqk', qh, kh) / math.sqrt(hd)
    causal = jnp.tril(jnp.ones((S, S), bool))
    s = jnp.where(causal[None, None], s, jnp.float32(-10000.0))
    if attention_mask is not None:
        s = s + attention_mask.reshape(B, 1, 1, S).astype(s.dtype)
    p = jax.nn.softmax(s, axis=-1)
    ctx = jnp.einsum('bhqk,bhkd->bhqd', p, vh)
    ctx = ctx.transpose(0, 2, 1, 3).reshape(B, S, D)
    x1 = residual + (ctx @ wo + bo)
    xn2 = ln(x1, ln2g, ln2b)
    h = jax.nn.gelu(xn2 @ w1 + b1, approximate=True)
    return x1 + (h @ w2 + b2)


def init_params(key, dim, mlp_ratio):
    inter = int(dim * mlp_ratio)
    ks = jax.random.split(key, 12)
    std = 0.02

    def w(k, shape):
        return (std * jax.random.normal(k, shape)).astype(jnp.float32)

    ln1g = jnp.ones((1, dim), jnp.float32)
    ln1b = jnp.zeros((1, dim), jnp.float32)
    ln2g = jnp.ones((1, dim), jnp.float32)
    ln2b = jnp.zeros((1, dim), jnp.float32)

    wq = w(ks[0], (dim, dim)); bq = w(ks[6], (1, dim))
    wk = w(ks[1], (dim, dim)); bk = w(ks[7], (1, dim))
    wv = w(ks[2], (dim, dim)); bv = w(ks[8], (1, dim))
    wo = w(ks[3], (dim, dim)); bo = w(ks[9], (1, dim))
    w1 = w(ks[4], (dim, inter)); b1 = w(ks[10], (1, inter))
    w2 = w(ks[5], (inter, dim)); b2 = w(ks[11], (1, dim))

    return (ln1g, ln1b, wq, bq, wk, bk, wv, bv, wo, bo,
            ln2g, ln2b, w1, b1, w2, b2)


if __name__ == "__main__":
    B, S, D = 2, 8, 32
    num_heads = 4
    mlp_ratio = 4.0

    key = jax.random.PRNGKey(0)
    kx, kp = jax.random.split(key)
    x = jax.random.normal(kx, (B, S, D), dtype=jnp.float32)
    params = init_params(kp, D, mlp_ratio)

    out, mask = gpt_block_forward(x, params, num_heads=num_heads, eps=1e-5)
    out = jax.block_until_ready(out)
    assert out.shape == (B, S, D) and out.dtype == jnp.float32

    ref = gpt_block_reference(x, params, num_heads=num_heads, eps=1e-5)
    err = float(jnp.max(jnp.abs(out - ref)))
    assert err < 5e-2, f"max abs error vs reference: {err}"
    print("KERNEL_OK")
</pallas_src>

<mosaic_0001>
module attributes {stable_mosaic.version = 11 : i64} {
  func.func @_copy(%arg0: i32, %arg1: memref<8x128xf32, #tpu.memory_space<vmem>>, %arg2: memref<8x128xf32, #tpu.memory_space<vmem>>) attributes {dimension_semantics = [#tpu.dimension_semantics<arbitrary>], iteration_bounds = array<i64: 2>, scalar_prefetch = 0 : i64, scratch_operands = 0 : i64, tpu.core_type = #tpu.core_type<tc>, window_params = [{pipeline_mode = #tpu.pipeline_mode<synchronous>, transform_indices = @transform_0, window_bounds = array<i64: 8, 128>}, {pipeline_mode = #tpu.pipeline_mode<synchronous>, transform_indices = @transform_1, window_bounds = array<i64: 8, 128>}]} {
    %c0 = arith.constant 0 : index
    %c0_0 = arith.constant 0 : index
    %0 = vector.load %arg1[%c0, %c0_0] : memref<8x128xf32, #tpu.memory_space<vmem>>, vector<8x128xf32>
    %c0_1 = arith.constant 0 : index
    %c0_2 = arith.constant 0 : index
    %1 = vector.load %arg2[%c0_1, %c0_2] : memref<8x128xf32, #tpu.memory_space<vmem>>, vector<8x128xf32>
    tpu.vector_store %arg2[%c0_1, %c0_2], %0 {strides = array<i32>} : memref<8x128xf32, #tpu.memory_space<vmem>>, vector<8x128xf32>,
    return
  }
  func.func @transform_0(%arg0: i32) -> (i32, i32) {
    %c0_i32 = arith.constant 0 : i32
    %c0_i32_0 = arith.constant 0 : i32
    %c0_i32_1 = arith.constant 0 : i32
    return %c0_i32, %c0_i32_0 : i32, i32
  }
  func.func @transform_1(%arg0: i32) -> (i32, i32) {
    %c0_i32 = arith.constant 0 : i32
    %c0_i32_0 = arith.constant 0 : i32
    %c0_i32_1 = arith.constant 0 : i32
    return %c0_i32, %c0_i32_0 : i32, i32
  }
}

module attributes {stable_mosaic.version = 11 : i64} {
  func.func @ln_qkv_kernel(%arg0: i32, %arg1: memref<16x32xf32, #tpu.memory_space<vmem>>, %arg2: memref<1x32xf32, #tpu.memory_space<vmem>>, %arg3: memref<1x32xf32, #tpu.memory_space<vmem>>, %arg4: memref<32x96xbf16, #tpu.memory_space<vmem>>, %arg5: memref<1x96xf32, #tpu.memory_space<vmem>>, %arg6: memref<16x96xbf16, #tpu.memory_space<vmem>>) attributes {dimension_semantics = [#tpu.dimension_semantics<parallel>], iteration_bounds = array<i64: 1>, scalar_prefetch = 0 : i64, scratch_operands = 0 : i64, tpu.core_type = #tpu.core_type<tc>, window_params = [{transform_indices = @transform_0, window_bounds = array<i64: 16, 32>}, {pipeline_mode = #tpu.pipeline_mode<synchronous>, transform_indices = @transform_1, window_bounds = array<i64: 1, 32>}, {pipeline_mode = #tpu.pipeline_mode<synchronous>, transform_indices = @transform_2, window_bounds = array<i64: 1, 32>}, {pipeline_mode = #tpu.pipeline_mode<synchronous>, transform_indices = @transform_3, window_bounds = array<i64: 32, 96>}, {pipeline_mode = #tpu.pipeline_mode<synchronous>, transform_indices = @transform_4, window_bounds = array<i64: 1, 96>}, {transform_indices = @transform_5, window_bounds = array<i64: 16, 96>}]} {
    %c0 = arith.constant 0 : index
    %c0_0 = arith.constant 0 : index
    %0 = vector.load %arg1[%c0, %c0_0] : memref<16x32xf32, #tpu.memory_space<vmem>>, vector<16x32xf32>
    %c0_1 = arith.constant 0 : index
    %c0_2 = arith.constant 0 : index
    %1 = vector.load %arg2[%c0_1, %c0_2] : memref<1x32xf32, #tpu.memory_space<vmem>>, vector<1x32xf32>
    %2 = vector.shape_cast %1 : vector<1x32xf32> to vector<32xf32>
    %c0_3 = arith.constant 0 : index
    %c0_4 = arith.constant 0 : index
    %3 = vector.load %arg3[%c0_3, %c0_4] : memref<1x32xf32, #tpu.memory_space<vmem>>, vector<1x32xf32>
    %4 = vector.shape_cast %3 : vector<1x32xf32> to vector<32xf32>
    %cst = arith.constant dense<0.000000e+00> : vector<16xf32>
    %5 = vector.multi_reduction <add>, %0, %cst [1] : vector<16x32xf32> to vector<16xf32>
    %6 = vector.shape_cast %5 : vector<16xf32> to vector<16x1xf32>
    %cst_5 = arith.constant 3.200000e+01 : f32
    %7 = vector.broadcast %cst_5 : f32 to vector<16x1xf32>
    %8 = arith.divf %6, %7 : vector<16x1xf32>
    %9 = vector.broadcast %8 : vector<16x1xf32> to vector<16x32xf32>
    %10 = arith.subf %0, %9 : vector<16x32xf32>
    %11 = arith.mulf %10, %10 : vector<16x32xf32>
    %cst_6 = arith.constant dense<0.000000e+00> : vector<16xf32>
    %12 = vector.multi_reduction <add>, %11, %cst_6 [1] : vector<16x32xf32> to vector<16xf32>
    %13 = vector.shape_cast %12 : vector<16xf32> to vector<16x1xf32>
    %cst_7 = arith.constant 3.200000e+01 : f32
    %14 = vector.broadcast %cst_7 : f32 to vector<16x1xf32>
    %15 = arith.divf %13, %14 : vector<16x1xf32>
    %16 = vector.broadcast %8 : vector<16x1xf32> to vector<16x32xf32>
    %17 = arith.subf %0, %16 : vector<16x32xf32>
    %cst_8 = arith.constant 9.99999974E-6 : f32
    %18 = vector.broadcast %cst_8 : f32 to vector<16x1xf32>
    %19 = arith.addf %15, %18 : vector<16x1xf32>
    %20 = math.rsqrt %19 : vector<16x1xf32>
    %21 = vector.broadcast %20 : vector<16x1xf32> to vector<16x32xf32>
    %22 = arith.mulf %17, %21 : vector<16x32xf32>
    %23 = vector.shape_cast %2 : vector<32xf32> to vector<1x32xf32>
    %24 = vector.broadcast %23 : vector<1x32xf32> to vector<16x32xf32>
    %25 = arith.mulf %22, %24 : vector<16x32xf32>
    %26 = vector.shape_cast %4 : vector<32xf32> to vector<1x32xf32>
    %27 = vector.broadcast %26 : vector<1x32xf32> to vector<16x32xf32>
    %28 = arith.addf %25, %27 : vector<16x32xf32>
    %29 = arith.truncf %28 : vector<16x32xf32> to vector<16x32xbf16>
    %c0_9 = arith.constant 0 : index
    %c0_10 = arith.constant 0 : index
    %30 = vector.load %arg4[%c0_9, %c0_10] : memref<32x96xbf16, #tpu.memory_space<vmem>>, vector<32x96xbf16>
    %cst_11 = arith.constant dense<0.000000e+00> : vector<16x96xf32>
    %31 = tpu.matmul %29, %30, %cst_11 {dimension_numbers = #tpu.dot_dimension_numbers<[1], [0], [0], [1], [0, 0, 1, 1], [], []>} : vector<16x32xbf16>, vector<32x96xbf16>, vector<16x96xf32> -> vector<16x96xf32>
    %c0_12 = arith.constant 0 : index
    %c0_13 = arith.constant 0 : index
    %32 = vector.load %arg5[%c0_12, %c0_13] : memref<1x96xf32, #tpu.memory_space<vmem>>, vector<1x96xf32>
    %33 = vector.shape_cast %32 : vector<1x96xf32> to vector<96xf32>
    %34 = vector.shape_cast %33 : vector<96xf32> to vector<1x96xf32>
    %35 = vector.broadcast %34 : vector<1x96xf32> to vector<16x96xf32>
    %36 = arith.addf %31, %35 : vector<16x96xf32>
    %37 = arith.truncf %36 : vector<16x96xf32> to vector<16x96xbf16>
    %c0_14 = arith.constant 0 : index
    %c0_15 = arith.constant 0 : index
    %38 = vector.load %arg6[%c0_14, %c0_15] : memref<16x96xbf16, #tpu.memory_space<vmem>>, vector<16x96xbf16>
    tpu.vector_store %arg6[%c0_14, %c0_15], %37 {strides = array<i32>} : memref<16x96xbf16, #tpu.memory_space<vmem>>, vector<16x96xbf16>,
    return
  }
  func.func @transform_0(%arg0: i32) -> (i32, i32) {
    %c0_i32 = arith.constant 0 : i32
    %c0_i32_0 = arith.constant 0 : i32
    return %arg0, %c0_i32 : i32, i32
  }
  func.func @transform_1(%arg0: i32) -> (i32, i32) {
    %c0_i32 = arith.constant 0 : i32
    %c0_i32_0 = arith.constant 0 : i32
    %c0_i32_1 = arith.constant 0 : i32
    return %c0_i32, %c0_i32_0 : i32, i32
  }
  func.func @transform_2(%arg0: i32) -> (i32, i32) {
    %c0_i32 = arith.constant 0 : i32
    %c0_i32_0 = arith.constant 0 : i32
    %c0_i32_1 = arith.constant 0 : i32
    return %c0_i32, %c0_i32_0 : i32, i32
  }
  func.func @transform_3(%arg0: i32) -> (i32, i32) {
    %c0_i32 = arith.constant 0 : i32
    %c0_i32_0 = arith.constant 0 : i32
    %c0_i32_1 = arith.constant 0 : i32
    return %c0_i32, %c0_i32_0 : i32, i32
  }
  func.func @transform_4(%arg0: i32) -> (i32, i32) {
    %c0_i32 = arith.constant 0 : i32
    %c0_i32_0 = arith.constant 0 : i32
    %c0_i32_1 = arith.constant 0 : i32
    return %c0_i32, %c0_i32_0 : i32, i32
  }
  func.func @transform_5(%arg0: i32) -> (i32, i32) {
    %c0_i32 = arith.constant 0 : i32
    %c0_i32_0 = arith.constant 0 : i32
    return %arg0, %c0_i32 : i32, i32
  }
}

</mosaic_0001>

<llo_original>
// kernel: tpu_custom_call.1
$region0: #{tpu_custom_call.1}
  #allocation0 [shape = 'u32[]', space=smem, size = 0x4, offset = 0x4, fixed_abs, tag = 'smem constant byte address 0x4 - core index']
  #allocation1 [shape = 'u32[144,128]{1,0:T(1,128)}', space=vmem, size = 0x12000, scoped, tag = 'internal scratch']
  %s0 = inlined_call_operand.hbm [shape: f32[8,128], index: 0, kind: input, shape index: {}]
  %s1 = inlined_call_operand.hbm [shape: f32[8,128], index: 1, kind: output, shape index: {}]
  %s2 = sld [smem:[#allocation0]]
  $region41: #{tpu_custom_call.1} parent=0
    _
  %s4 = ssub.s32 1, %s2
  %s5 = scalar_select 0, %s4, %s2
  $region1: #{tpu_custom_call.1} parent=0
    #allocation2 [shape = 'u8[4096]{0}', space=vmem, size = 0x1000, scoped, tag = 'input window, operand 0, single buffered']
    #allocation3 [shape = 's32[2]{0}', space=sflag, size = 0x8, scoped, tag = 'scoped memory for tpu_custom_call.1']
    #allocation4 [shape = 's32[2]{0}', space=sflag, size = 0x8, scoped, tag = 'scoped memory for tpu_custom_call.1']
    #allocation5 [shape = 'u8[4096]{0}', space=vmem, size = 0x1000, scoped, tag = 'output window, operand 0, single buffered']
    %6 = vsyncpa [#allocation3], 0
    %7 = vsyncpa [#allocation4], 0
    loop: start=0, step=1, limit=4
    $region2: #{tpu_custom_call.1} parent=1 // loop_pre_header
      _
    $region3: #{tpu_custom_call.1} parent=1 // loop_header
      %s9 = sphi 0, %s13
      %p10 = scmp.ge.s32.totalorder %s9, 4
      %s17 = sphi 0, %s17
      %s19 = sphi 0, %s17
      %s20 = sphi 0, %s19
      %s34 = sphi 0, %s20
      %s38 = sphi 0, %s38
      %s40 = sphi 0, %s38
      %s41 = sphi 0, %s40
      %s55 = sphi 0, %s41
    $region4: #{tpu_custom_call.1} parent=1 // loop_header_branch
      %12 = sbr.rel (%p10) target = $region8
    $region5: #{tpu_custom_call.1} parent=1 // loop_body
      %s14 = ssub.s32 %s9, 1
      %s15 = ssub.s32 %s9, 2
      %s16 = sadd.s32 %s9, 1
      %s18 = sadd.s32 %s17, 1
      %p21 = scmp.eq.s32.totalorder %s9, 1
      %p22 = scmp.ne.s32.totalorder %s17, %s19
      %p23 = scmp.eq.s32.totalorder %s9, 0
      %p24 = por %p22, %p23
      %p25 = scmp.ne.s32.totalorder %s17, %s19
      %p26 = scmp.eq.s32.totalorder %s14, 1
      %p27 = por %p25, %p26
      %p28 = scmp.ne.s32.totalorder %s19, %s20
      %p29 = scmp.eq.s32.totalorder %s14, 0
      %p30 = por %p28, %p29
      %p31 = scmp.ne.s32.totalorder %s19, %s20
      %p32 = scmp.eq.s32.totalorder %s15, 1
      %p33 = por %p31, %p32
      %p35 = scmp.ne.s32.totalorder %s20, %s34
      %p36 = scmp.eq.s32.totalorder %s15, 0
      %p37 = por %p35, %p36
      %s39 = sadd.s32 %s38, 1
      %p42 = scmp.eq.s32.totalorder %s9, 1
      %p43 = scmp.ne.s32.totalorder %s38, %s40
      %p44 = scmp.eq.s32.totalorder %s9, 0
      %p45 = por %p43, %p44
      %p46 = scmp.ne.s32.totalorder %s38, %s40
      %p47 = scmp.eq.s32.totalorder %s14, 1
      %p48 = por %p46, %p47
      %p49 = scmp.ne.s32.totalorder %s40, %s41
      %p50 = scmp.eq.s32.totalorder %s14, 0
      %p51 = por %p49, %p50
      %p52 = scmp.ne.s32.totalorder %s40, %s41
      %p53 = scmp.eq.s32.totalorder %s15, 1
      %p54 = por %p52, %p53
      %p56 = scmp.ne.s32.totalorder %s41, %s55
      %p57 = scmp.eq.s32.totalorder %s15, 0
      %p58 = por %p56, %p57
      %p59 = scmp.le.s32.totalorder 1, %s9
      %p60 = scmp.lt.s32.totalorder %s9, 3
      %p61 = pnand %p59, %p60
      %p62 = pneg %p61
      // Predicated region
      $region9: #{tpu_custom_call.1} parent=5 // pred_check
        _
      $region10: #{tpu_custom_call.1} parent=5 // pred_check_branch
        %64 = sbr.rel (%p61) target = $region12
      $region11: #{tpu_custom_call.1} parent=5 // pred_region
        %s65 = ssub.s32 %s9, 1
        // Predicated region
        $region13: #{tpu_custom_call.1} parent=11 // pred_check
          %p66 = pneg %p30
        $region14: #{tpu_custom_call.1} parent=11 // pred_check_branch
          %68 = sbr.rel (%p66) target = $region16
        $region15: #{tpu_custom_call.1} parent=11 // pred_region
          %s70 = ssub.s32 128, 128
          %71 = vsyncadd [#allocation3], %s70
          %s73 = sshll.u32 [#allocation2], 4
          %s74 = int_to_ptr.vmem [resolvable:$true] %s73
          %76 = dma.hbm_to_vmem [thread:$0]  %s0, 128, %s74, [#allocation3]
        $region16: #{tpu_custom_call.1} parent=11 // pred_fallthru
          _
      $region12: #{tpu_custom_call.1} parent=5 // pred_fallthru
        _
      %p77 = scmp.lt.s32.totalorder %s9, 2
      // Predicated region
      $region17: #{tpu_custom_call.1} parent=5 // pred_check
        %p78 = pneg %p77
      $region18: #{tpu_custom_call.1} parent=5 // pred_check_branch
        %80 = sbr.rel (%p78) target = $region20
      $region19: #{tpu_custom_call.1} parent=5 // pred_region
        _
      $region20: #{tpu_custom_call.1} parent=5 // pred_fallthru
        _
      %p81 = scmp.le.s32.totalorder 1, %s9
      %p82 = scmp.lt.s32.totalorder %s9, 3
      %p83 = pnand %p81, %p82
      %p84 = pneg %p83
      // Predicated region
      $region21: #{tpu_custom_call.1} parent=5 // pred_check
        _
      $region22: #{tpu_custom_call.1} parent=5 // pred_check_branch
        %86 = sbr.rel (%p83) target = $region24
      $region23: #{tpu_custom_call.1} parent=5 // pred_region
        %s87 = ssub.s32 %s9, 1
        // Predicated region
        $region25: #{tpu_custom_call.1} parent=23 // pred_check
          %p88 = pneg %p30
        $region26: #{tpu_custom_call.1} parent=23 // pred_check_branch
          %90 = sbr.rel (%p88) target = $region28
        $region27: #{tpu_custom_call.1} parent=23 // pred_region
          %91 = dma.done [#allocation3], 128
        $region28: #{tpu_custom_call.1} parent=23 // pred_fallthru
          _
        %p92 = pneg %p30
        %p93 = pneg %p27
        %p94 = pneg %p51
        %p95 = pneg %p48
        %v96 = vld [vmem:[#allocation2] sm:$0xff]
        %97 = vst [vmem:[#allocation5] sm:$0xff] %v96
        // Predicated region
        $region29: #{tpu_custom_call.1} parent=23 // pred_check
          %p98 = pneg %p48
        $region30: #{tpu_custom_call.1} parent=23 // pred_check_branch
          %100 = sbr.rel (%p98) target = $region32
        $region31: #{tpu_custom_call.1} parent=23 // pred_region
          %s102 = ssub.s32 128, 128
          %103 = vsyncadd [#allocation4], %s102
          %s105 = sshll.u32 [#allocation5], 4
          %s106 = int_to_ptr.vmem [resolvable:$true] %s105
          %108 = dma.vmem_to_hbm [thread:$0]  %s106, 128, %s1, [#allocation4]
        $region32: #{tpu_custom_call.1} parent=23 // pred_fallthru
          _
        // Predicated region
        $region33: #{tpu_custom_call.1} parent=23 // pred_check
          %p109 = pneg %p48
        $region34: #{tpu_custom_call.1} parent=23 // pred_check_branch
          %111 = sbr.rel (%p109) target = $region36
        $region35: #{tpu_custom_call.1} parent=23 // pred_region
          %112 = dma.done [#allocation4], 128
        $region36: #{tpu_custom_call.1} parent=23 // pred_fallthru
          _
      $region24: #{tpu_custom_call.1} parent=5 // pred_fallthru
        _
      %p113 = scmp.le.s32.totalorder 2, %s9
      // Predicated region
      $region37: #{tpu_custom_call.1} parent=5 // pred_check
        %p114 = pneg %p113
      $region38: #{tpu_custom_call.1} parent=5 // pred_check_branch
        %116 = sbr.rel (%p114) target = $region40
      $region39: #{tpu_custom_call.1} parent=5 // pred_region
        %s117 = ssub.s32 %s9, 2
      $region40: #{tpu_custom_call.1} parent=5 // pred_fallthru
        _
    $region6: #{tpu_custom_call.1} parent=1 // loop_footer
      %s13 = sadd.s32 1, %s9
    $region7: #{tpu_custom_call.1} parent=1 // loop_footer_branch
      %8 = sbr.rel target = $region3
    $region8: #{tpu_custom_call.1} parent=1 // loop_exit
      _
    %118 = vsyncpa [#allocation3], 1
    %s119 = scalar_lea.sflag [#allocation3], 1
    %120 = vsyncpa %s119, 1
    %121 = vsyncpa [#allocation4], 1
    %s122 = scalar_lea.sflag [#allocation4], 1
    %123 = vsyncpa %s122, 1

// kernel: tpu_custom_call.1
$region0: #{tpu_custom_call.1}
  #allocation0 [shape = 'u32[]', space=smem, size = 0x4, offset = 0x4, fixed_abs, tag = 'smem constant byte address 0x4 - core index']
  #allocation1 [shape = 'u32[144,128]{1,0:T(1,128)}', space=vmem, size = 0x12000, scoped, tag = 'internal scratch']
  %s0 = inlined_call_operand.hbm [shape: f32[16,32], index: 0, kind: input, shape index: {}]
  %s1 = inlined_call_operand.vmem [shape: f32[1,32], index: 1, kind: input, shape index: {}]
  %s2 = inlined_call_operand.vmem [shape: f32[1,32], index: 2, kind: input, shape index: {}]
  %s3 = inlined_call_operand.hbm [shape: bf16[32,96], index: 3, kind: input, shape index: {}]
  %s4 = inlined_call_operand.vmem [shape: f32[1,96], index: 4, kind: input, shape index: {}]
  %s5 = inlined_call_operand.hbm [shape: bf16[16,96], index: 5, kind: output, shape index: {}]
  %s6 = sld [smem:[#allocation0]]
  $region38: #{tpu_custom_call.1} parent=0
    _
  %s8 = ssub.s32 1, %s6
  %s9 = scalar_select 0, %s8, %s6
  $region1: #{tpu_custom_call.1} parent=0
    #allocation2 [shape = 'u8[8192]{0}', space=vmem, size = 0x2000, scoped, tag = 'input window, operand 0, single buffered']
    #allocation3 [shape = 's32[1]{0}', space=sflag, size = 0x4, scoped, tag = 'scoped memory for tpu_custom_call.1']
    #allocation4 [shape = 's32[1]{0}', space=sflag, size = 0x4, scoped, tag = 'scoped memory for tpu_custom_call.1']
    #allocation5 [shape = 'u8[8192]{0}', space=vmem, size = 0x2000, scoped, tag = 'input window, operand 3, single buffered']
    #allocation6 [shape = 's32[1]{0}', space=sflag, size = 0x4, scoped, tag = 'scoped memory for tpu_custom_call.1']
    #allocation7 [shape = 'u8[4096]{0}', space=vmem, size = 0x1000, scoped, tag = 'output window, operand 0, single buffered']
    %10 = vsyncpa [#allocation3], 0
    %11 = vsyncpa [#allocation6], 0
    %12 = vsyncpa [#allocation4], 0
    // Predicated region
    $region2: #{tpu_custom_call.1} parent=1 // pred_check
      _
    $region3: #{tpu_custom_call.1} parent=1 // pred_check_branch
      %14 = sbr.rel (0) target = $region5
    $region4: #{tpu_custom_call.1} parent=1 // pred_region
      %s16 = ssub.s32 256, 256
      %17 = vsyncadd [#allocation3], %s16
      %s18 = sshll.u32 [#allocation2], 4
      %s19 = int_to_ptr.vmem [resolvable:$true] %s18
      %24 = dma.hbm_to_vmem [thread:$0]  %s0, 256, %s19, [#allocation3], 128, 128, 8
    $region5: #{tpu_custom_call.1} parent=1 // pred_fallthru
      _
    // Predicated region
    $region6: #{tpu_custom_call.1} parent=1 // pred_check
      _
    $region7: #{tpu_custom_call.1} parent=1 // pred_check_branch
      %26 = sbr.rel (0) target = $region9
    $region8: #{tpu_custom_call.1} parent=1 // pred_region
      _
    $region9: #{tpu_custom_call.1} parent=1 // pred_fallthru
      _
    // Predicated region
    $region10: #{tpu_custom_call.1} parent=1 // pred_check
      _
    $region11: #{tpu_custom_call.1} parent=1 // pred_check_branch
      %28 = sbr.rel (0) target = $region13
    $region12: #{tpu_custom_call.1} parent=1 // pred_region
      _
    $region13: #{tpu_custom_call.1} parent=1 // pred_fallthru
      _
    // Predicated region
    $region14: #{tpu_custom_call.1} parent=1 // pred_check
      _
    $region15: #{tpu_custom_call.1} parent=1 // pred_check_branch
      %30 = sbr.rel (0) target = $region17
    $region16: #{tpu_custom_call.1} parent=1 // pred_region
      %s32 = ssub.s32 256, 256
      %33 = vsyncadd [#allocation6], %s32
      %s34 = sshll.u32 [#allocation5], 4
      %s35 = int_to_ptr.vmem [resolvable:$true] %s34
      %40 = dma.hbm_to_vmem [thread:$0]  %s3, 256, %s35, [#allocation6], 64, 64, 4
    $region17: #{tpu_custom_call.1} parent=1 // pred_fallthru
      _
    // Predicated region
    $region18: #{tpu_custom_call.1} parent=1 // pred_check
      _
    $region19: #{tpu_custom_call.1} parent=1 // pred_check_branch
      %42 = sbr.rel (0) target = $region21
    $region20: #{tpu_custom_call.1} parent=1 // pred_region
      _
    $region21: #{tpu_custom_call.1} parent=1 // pred_fallthru
      _
    // Predicated region
    $region22: #{tpu_custom_call.1} parent=1 // pred_check
      _
    $region23: #{tpu_custom_call.1} parent=1 // pred_check_branch
      %44 = sbr.rel (0) target = $region25
    $region24: #{tpu_custom_call.1} parent=1 // pred_region
      %45 = dma.done [#allocation3], 256
    $region25: #{tpu_custom_call.1} parent=1 // pred_fallthru
      _
    // Predicated region
    $region26: #{tpu_custom_call.1} parent=1 // pred_check
      _
    $region27: #{tpu_custom_call.1} parent=1 // pred_check_branch
      %47 = sbr.rel (0) target = $region29
    $region28: #{tpu_custom_call.1} parent=1 // pred_region
      %48 = dma.done [#allocation6], 256
    $region29: #{tpu_custom_call.1} parent=1 // pred_fallthru
      _
    %v50 = vld [vmem:[#allocation2] sm:$0xff]
    %v51 = vld [vmem:[#allocation2 + $0x8] sm:$0xff]
    %v52 = vld [vmem:[%s1] sm:$0x1]
    %v53 = vld [vmem:[%s2] sm:$0x1]
    %vm54 = vcmask 261120
    %v55 = vsel %vm54, %v50, 0.0
    %56 = vadd.xlane.f32.xlu0 %v55
    %v57 = vpop.xlane.xlu0 %56
    %v58 = vsel %vm54, %v51, 0.0
    %59 = vadd.xlane.f32.xlu0 %v58
    %v60 = vpop.xlane.xlu0 %59
    %v61 = vrcp.pop 32.0
    %v62 = vmul.f32 %v57, %v61
    %v63 = vmul.f32 %v60, %v61
    %v64 = vsub.f32 %v50, %v62
    %v65 = vsub.f32 %v51, %v63
    %v66 = vmul.f32 %v64, %v64
    %v67 = vmul.f32 %v65, %v65
    %v68 = vsel %vm54, %v66, 0.0
    %69 = vadd.xlane.f32.xlu0 %v68
    %v70 = vpop.xlane.xlu0 %69
    %v71 = vsel %vm54, %v67, 0.0
    %72 = vadd.xlane.f32.xlu0 %v71
    %v73 = vpop.xlane.xlu0 %72
    %v74 = vmul.f32 %v70, %v61
    %v75 = vmul.f32 %v73, %v61
    %v76 = vadd.f32 %v74, 1e-05
    %v77 = vadd.f32 %v75, 1e-05
    %v78 = vrsqrt.pop %v76
    %v79 = vrsqrt.pop %v77
    %v80 = vmul.f32 %v64, %v78
    %v81 = vmul.f32 %v65, %v79
    %v83 = vlaneseq
    %v84 = vshrl.u32 %v83, 7
    %v85 = vsub.s32 0, %v84
    %v86 = vrot.slane %v52, %v85
    %v88 = vmul.f32 %v80, %v86
    %v89 = vmul.f32 %v81, %v86
    %v91 = vlaneseq
    %v92 = vshrl.u32 %v91, 7
    %v93 = vsub.s32 0, %v92
    %v94 = vrot.slane %v53, %v93
    %v96 = vadd.f32 %v88, %v94
    %v97 = vadd.f32 %v89, %v94
    %v98 = vpack.c.bf16 %v97, %v96
    %v99 = vld [vmem:[#allocation5] sm:$0xf]
    %v100 = vld [vmem:[#allocation5 + $0x4] sm:$0xf]
    %v101 = vld [vmem:[#allocation5 + $0x8] sm:$0xf]
    %v102 = vld [vmem:[#allocation5 + $0xc] sm:$0xf]
    %v103 = vld [vmem:[%s4] sm:$0x1]
    %v105 = vlaneseq
    %v106 = vshrl.u32 %v105, 7
    %v107 = vsub.s32 0, %v106
    %v108 = vrot.slane %v103, %v107
    %v114 = vunpack.c.l.b16 %v99
    %v115 = vunpack.c.l.b16 %v100
    %v116 = vunpack.c.l.b16 %v101
    %v117 = vunpack.c.l.b16 %v102
    %v118 = vpack.c.b16 %v115, %v114
    %v119 = vpack.c.b16 %v117, %v116
    %v123 = vsel %vm54, %v98, 0
    %125 = vmatprep.subr.bf16.mxu0 0
    %126 = vmatpush1.bf16.msra.mxu0 0
    %127 = vmatprep.subr.bf16.mxu0 0
    %128 = vmatpush1.bf16.msra.mxu0 0
    %129 = vmatprep.subr.bf16.mxu0 0
    %130 = vmatpush1.bf16.msra.mxu0 0
    %131 = vmatprep.subr.bf16.mxu0 0
    %132 = vmatpush1.bf16.msra.mxu0 0
    %133 = vmatprep.subr.bf16.mxu0 0
    %134 = vmatpush1.bf16.msra.mxu0 0
    %135 = vmatprep.subr.bf16.mxu0 0
    %136 = vmatpush1.bf16.msra.mxu0 0
    %137 = vmatprep.subr.bf16.mxu0 0
    %138 = vmatpush1.bf16.msra.mxu0 %v119
    %139 = vmatprep.subr.bf16.mxu0 0
    %140 = vmatpush1.bf16.msra.mxu0 %v118
    %141 = vmatprep.subr.bf16.mxu0 0
    %142 = vmatpush2.bf16.msra.mxu0 0
    %143 = vmatprep.subr.bf16.mxu0 0
    %144 = vmatpush2.bf16.msra.mxu0 0
    %145 = vmatprep.subr.bf16.mxu0 0
    %146 = vmatpush2.bf16.msra.mxu0 0
    %147 = vmatprep.subr.bf16.mxu0 0
    %148 = vmatpush2.bf16.msra.mxu0 0
    %149 = vmatprep.subr.bf16.mxu0 0
    %150 = vmatpush2.bf16.msra.mxu0 0
    %151 = vmatprep.subr.bf16.mxu0 0
    %152 = vmatpush2.bf16.msra.mxu0 0
    %153 = vmatprep.subr.bf16.mxu0 0
    %154 = vmatpush2.bf16.msra.mxu0 0
    %155 = vmatprep.subr.bf16.mxu0 0
    %156 = vmatpush2.bf16.msra.mxu0 0
    %157 = vmatprep.mubr.bf16.mxu0 0
    %158 = vmatmul.mubr.bf16.gmra.mxu0 %v123
    %v159 = vpop.f32.mrf.mxu0
    %v160 = vadd.f32 %v108, %v159
    %v161 = vpop.f32.mrf.mxu0
    %v162 = vpop.f32.mrf.mxu0
    %v163 = vadd.f32 %v108, %v162
    %v164 = vpop.f32.mrf.mxu0
    %165 = vdwg.mxu0
    %v166 = vpack.c.bf16 %v163, %v160
    %v168 = vunpack.c.l.b16 %v166
    %v169 = vunpack.c.h.b16 %v166
    %v170 = vpack.c.b16 %v168, %v168
    %v171 = vpack.c.b16 %v169, %v169
    %vm174 = vcmask 781312
    %175 = vst.msk [vmem:[#allocation7] sm:$0xf] %vm174, %v170
    %176 = vst.msk [vmem:[#allocation7 + $0x4] sm:$0xf] %vm174, %v171
    // Predicated region
    $region30: #{tpu_custom_call.1} parent=1 // pred_check
      _
    $region31: #{tpu_custom_call.1} parent=1 // pred_check_branch
      %178 = sbr.rel (0) target = $region33
    $region32: #{tpu_custom_call.1} parent=1 // pred_region
      %s180 = ssub.s32 128, 128
      %181 = vsyncadd [#allocation4], %s180
      %s182 = sshll.u32 [#allocation7], 4
      %s183 = int_to_ptr.vmem [resolvable:$true] %s182
      %188 = dma.vmem_to_hbm [thread:$0]  %s183, 128, %s5, [#allocation4], 64, 64, 4
    $region33: #{tpu_custom_call.1} parent=1 // pred_fallthru
      _
    // Predicated region
    $region34: #{tpu_custom_call.1} parent=1 // pred_check
      _
    $region35: #{tpu_custom_call.1} parent=1 // pred_check_branch
      %190 = sbr.rel (0) target = $region37
    $region36: #{tpu_custom_call.1} parent=1 // pred_region
      %191 = dma.done [#allocation4], 128
    $region37: #{tpu_custom_call.1} parent=1 // pred_fallthru
      _
    %192 = vsyncpa [#allocation3], 1
    %193 = vsyncpa [#allocation6], 1
    %194 = vsyncpa [#allocation4], 1

</llo_original>
